<compile_context>
chip_gen: v6e
topology: v6e:2x2x1
jax: 0.10.0
libtpu: 0.0.40
codegen_flags: <defaults>
</compile_context>

<pallas_src>
import functools

import jax
import jax.numpy as jnp
from jax import lax
from jax.experimental import pallas as pl
from jax.experimental.pallas import tpu as pltpu

_SUBLANES = 8


# --------------------------------------------------------------------------- #
# Hardware detection (conservative fallbacks keep this safe everywhere).
# --------------------------------------------------------------------------- #
def _hw_params():
    vmem_cap = 64 << 20   # conservative default (v7x per-TC VMEM)
    cores = 1             # conservative default (v5e/v6e are single-TC)
    try:
        info = pltpu.get_tpu_info()
    except Exception:
        info = None
    if info is not None:
        v = getattr(info, "vmem_capacity_bytes", None)
        if isinstance(v, int) and v > 0:
            vmem_cap = v
        for attr in ("num_tensorcores", "tensorcores_per_chip",
                     "num_cores", "cores_per_chip"):
            c = getattr(info, attr, None)
            if isinstance(c, int) and c >= 1:
                cores = c
                break
    return vmem_cap, cores


# --------------------------------------------------------------------------- #
# Kernel: accumulate sublane-dense partial sums of the three global reductions.
# --------------------------------------------------------------------------- #
def _netloss_partial_kernel(o_ref, m_ref, om_ref, osm_ref, bce_ref, *,
                            binary_mask, mxu_fold, inner_axis):
    """o_ref/m_ref: (br, width) streamed tiles.  om/osm/bce: (1, 8, width) VMEM-
    resident accumulators (same output block across the inner 'arbitrary' axis)."""
    step = pl.program_id(inner_axis)

    @pl.when(step == 0)
    def _init():
        om_ref[...] = jnp.zeros_like(om_ref)
        osm_ref[...] = jnp.zeros_like(osm_ref)
        bce_ref[...] = jnp.zeros_like(bce_ref)

    o = o_ref[...].astype(jnp.float32)
    m = m_ref[...].astype(jnp.float32)
    br, width = o.shape

    if mxu_fold:
        # Block-diagonal 0/1 selector: output sublane j sums rows [j*br/8,(j+1)*br/8).
        # Offloads the per-step fold to the idle MXU, freeing the VALU slot.
        col = lax.broadcasted_iota(jnp.int32, (_SUBLANES, br), 1)
        row = lax.broadcasted_iota(jnp.int32, (_SUBLANES, br), 0)
        sel = (col // (br // _SUBLANES) == row).astype(jnp.float32)

        def fold_into(acc_ref, x):
            acc_ref[...] += jnp.dot(sel, x,
                                    preferred_element_type=jnp.float32)[None]
    else:
        # Tiny-block fallback (br too small / not a multiple of 8): VPU fold into
        # sublane 0 only, using full-vreg select (no masked partial stores).
        srow = lax.broadcasted_iota(jnp.int32, (_SUBLANES, width), 0)

        def fold_into(acc_ref, x):
            s = jnp.sum(x, axis=0, keepdims=True)           # (1, width)
            acc_ref[...] += jnp.where(srow == 0, s, 0.0)[None]

    # Dice ingredients.
    fold_into(om_ref, o * m)
    fold_into(osm_ref, o + m)

    # BCE ingredient (accumulated with positive sign; negated in the wrapper).
    if binary_mask:
        # Exact only for m in {0, 1}: one transcendental per element.
        bce_t = jnp.maximum(jnp.log(jnp.where(m > 0.5, o, 1.0 - o)), -100.0)
    else:
        # m*log(o) + (1-m)*log(1-o) == log(1-o) + m*(log(o) - log(1-o));
        # PyTorch BCELoss clamps each log term at -100.
        log_o = jnp.maximum(jnp.log(o), -100.0)
        log_1mo = jnp.maximum(jnp.log(1.0 - o), -100.0)
        bce_t = log_1mo + m * (log_o - log_1mo)
    fold_into(bce_ref, bce_t)


# --------------------------------------------------------------------------- #
# Plain-JAX pieces (small-input fast path, ragged tail, final scalar math).
# --------------------------------------------------------------------------- #
def _partial_sums_jax(o, m, binary_mask):
    o = o.reshape(-1).astype(jnp.float32)
    m = m.reshape(-1).astype(jnp.float32)
    inter = jnp.sum(o * m)
    osm = jnp.sum(o) + jnp.sum(m)
    if binary_mask:
        bce = jnp.sum(jnp.maximum(jnp.log(jnp.where(m > 0.5, o, 1.0 - o)), -100.0))
    else:
        log_o = jnp.maximum(jnp.log(o), -100.0)
        log_1mo = jnp.maximum(jnp.log(1.0 - o), -100.0)
        bce = jnp.sum(log_1mo + m * (log_o - log_1mo))
    return inter, osm, bce


def _combine(inter, osm_sum, bce_sum, n, weight, smooth):
    bce_loss = -bce_sum / n                                      # mean over true N
    dice_loss = 1.0 - (2.0 * inter + smooth) / (osm_sum + smooth)
    return weight * bce_loss + (1.0 - weight) * dice_loss


# --------------------------------------------------------------------------- #
# Public wrapper.
# --------------------------------------------------------------------------- #
def net_loss(outputs, mask, weight=0.5, smooth=1e-8, *,
             assume_binary_mask=False,
             block_elems=None, num_shards=None,
             min_kernel_elems=1 << 19):
    """Pallas implementation of NetLoss.forward(outputs, mask).

    `assume_binary_mask=True` is exact only for masks in {0, 1}."""
    n = int(outputs.size)
    o = outputs.reshape(-1)
    m = mask.reshape(-1)

    # Small-input fast path: launch + per-step overhead dominate; XLA fusion wins.
    if n < max(int(min_kernel_elems), 1):
        inter, osm, bce = _partial_sums_jax(o, m, assume_binary_mask)
        return _combine(inter, osm, bce, n, weight, smooth)

    vmem_cap, cores = _hw_params()
    core_parallel = getattr(pltpu, "CORE_PARALLEL", None)
    if num_shards is None:
        num_shards = 2 if (cores >= 2 and core_parallel is not None) else 1
    if num_shards > 1 and core_parallel is None:
        num_shards = 1

    if block_elems is None:
        # 2 inputs x 2 pipeline buffers x block must stay well inside scoped VMEM.
        block_elems = (2 << 20) if vmem_cap >= (96 << 20) else (1 << 20)

    # Lane-dense width that divides N => zero-copy reshape, no padding at all.
    width = None
    for w in (1024, 512, 256, 128):
        if n % w == 0:
            width = w
            break
    if width is None:
        # TODO(synk): width-misaligned N still pays one padded copy of both inputs;
        # a manual-DMA 1-D kernel (memory_space=pl.ANY) would remove it entirely.
        width = 1024
        pad = width - (n % width)
        o = jnp.pad(o, (0, pad))   # zeros contribute exactly 0 to every sum
        m = jnp.pad(m, (0, pad))

    rows = o.size // width
    br = max(_SUBLANES, (block_elems // width) // _SUBLANES * _SUBLANES)
    if rows <= br:
        br = rows                   # single block covering the whole (small) slab

    steps_total = rows // br        # kernel only touches full (br, width) blocks
    steps = steps_total // num_shards
    if steps == 0:
        num_shards, steps = 1, steps_total
    if steps == 0:
        inter, osm, bce = _partial_sums_jax(o, m, assume_binary_mask)
        return _combine(inter, osm, bce, n, weight, smooth)

    covered_rows = num_shards * steps * br
    o2 = o.reshape(rows, width)
    m2 = m.reshape(rows, width)

    kernel = functools.partial(
        _netloss_partial_kernel,
        binary_mask=assume_binary_mask,
        mxu_fold=(br % _SUBLANES == 0 and br >= 64),
        inner_axis=1 if num_shards > 1 else 0)

    acc_shape = jax.ShapeDtypeStruct((num_shards, _SUBLANES, width), jnp.float32)
    if num_shards > 1:
        grid = (num_shards, steps)
        in_map = lambda p, i: (p * steps + i, 0)
        out_map = lambda p, i: (p, 0, 0)
        semantics = (core_parallel, pltpu.ARBITRARY)
    else:
        grid = (steps,)
        in_map = lambda i: (i, 0)
        out_map = lambda i: (0, 0, 0)
        semantics = (pltpu.ARBITRARY,)

    in_spec = pl.BlockSpec((br, width), in_map)
    acc_spec = pl.BlockSpec((1, _SUBLANES, width), out_map)

    # Size the scoped VMEM limit to the actual double-buffered need (+ headroom).
    bytes_per_elem = o2.dtype.itemsize + m2.dtype.itemsize
    vmem_needed = 2 * br * width * bytes_per_elem + (8 << 20)
    vmem_limit = int(max(32 << 20, min(vmem_needed, vmem_cap - (8 << 20))))

    om_acc, osm_acc, bce_acc = pl.pallas_call(
        kernel,
        out_shape=(acc_shape, acc_shape, acc_shape),
        grid=grid,
        in_specs=[in_spec, in_spec],
        out_specs=(acc_spec, acc_spec, acc_spec),
        compiler_params=pltpu.CompilerParams(
            dimension_semantics=semantics,
            vmem_limit_bytes=vmem_limit),
    )(o2, m2)

    inter = jnp.sum(om_acc)
    osm = jnp.sum(osm_acc)
    bce = jnp.sum(bce_acc)

    # Ragged tail (< num_shards*br rows) reduced by plain XLA — no padding pass.
    tail_start = covered_rows * width
    if tail_start < o.size:
        t_inter, t_osm, t_bce = _partial_sums_jax(
            o[tail_start:], m[tail_start:], assume_binary_mask)
        inter = inter + t_inter
        osm = osm + t_osm
        bce = bce + t_bce

    return _combine(inter, osm, bce, n, weight, smooth)


# --------------------------------------------------------------------------- #
# Reference (pure JAX, mirrors the PyTorch module) and self-test.
# --------------------------------------------------------------------------- #
def _reference(outputs, mask, weight=0.5, smooth=1e-8):
    o = outputs.reshape(-1).astype(jnp.float32)
    m = mask.reshape(-1).astype(jnp.float32)
    inter = jnp.sum(o * m)
    dice = 1.0 - (2.0 * inter + smooth) / (jnp.sum(o) + jnp.sum(m) + smooth)
    bce = jnp.mean(-(m * jnp.maximum(jnp.log(o), -100.0)
                     + (1.0 - m) * jnp.maximum(jnp.log(1.0 - o), -100.0)))
    return weight * bce + (1.0 - weight) * dice


if __name__ == "__main__":
    key = jax.random.PRNGKey(0)
    k1, k2, k3, k4 = jax.random.split(key, 4)

    # 1) Module-scale small input (batch=2, channels=4, 16x16): fast JAX path.
    o_small = jax.nn.sigmoid(jax.random.normal(k1, (2, 4, 16, 16), jnp.float32))
    m_small = (jax.random.uniform(k2, (2, 4, 16, 16)) > 0.5).astype(jnp.float32)
    ref_small = _reference(o_small, m_small)
    loss_small = jax.block_until_ready(net_loss(o_small, m_small))
    assert jnp.allclose(loss_small, ref_small, rtol=1e-4, atol=1e-4), (loss_small, ref_small)

    # 2) Same input forced through the Pallas kernel (single tiny block).
    loss_small_k = jax.block_until_ready(
        net_loss(o_small, m_small, min_kernel_elems=0))
    assert jnp.allclose(loss_small_k, ref_small, rtol=1e-4, atol=1e-4), (loss_small_k, ref_small)

    # 3) Streaming case: multi-step pipeline + ragged JAX tail (1,280,000 elems).
    shape = (2, 4, 500, 320)
    o_big = jax.nn.sigmoid(jax.random.normal(k3, shape, jnp.float32))
    m_big = (jax.random.uniform(k4, shape) > 0.5).astype(jnp.float32)
    ref_big = _reference(o_big, m_big)
    loss_big = jax.block_until_ready(
        net_loss(o_big, m_big, min_kernel_elems=0, block_elems=1 << 18))
    assert jnp.allclose(loss_big, ref_big, rtol=1e-4, atol=1e-4), (loss_big, ref_big)

    #    Binary-mask fast path (mask here is genuinely {0,1}).
    loss_big_bin = jax.block_until_ready(
        net_loss(o_big, m_big, min_kernel_elems=0, block_elems=1 << 18,
                 assume_binary_mask=True))
    assert jnp.allclose(loss_big_bin, ref_big, rtol=1e-4, atol=1e-4), (loss_big_bin, ref_big)

    # 4) Width-misaligned element count exercises the padded fallback path.
    o_odd = jax.nn.sigmoid(jax.random.normal(k1, (2, 3, 37, 53), jnp.float32))
    m_odd = (jax.random.uniform(k2, (2, 3, 37, 53)) > 0.5).astype(jnp.float32)
    ref_odd = _reference(o_odd, m_odd)
    loss_odd = jax.block_until_ready(net_loss(o_odd, m_odd, min_kernel_elems=0))
    assert jnp.allclose(loss_odd, ref_odd, rtol=1e-4, atol=1e-4), (loss_odd, ref_odd)

    print("KERNEL_OK")
</pallas_src>

<mosaic_0001>
module attributes {stable_mosaic.version = 11 : i64} {
  func.func @_netloss_partial_kernel(%arg0: i32, %arg1: memref<2x1024xf32, #tpu.memory_space<vmem>>, %arg2: memref<2x1024xf32, #tpu.memory_space<vmem>>, %arg3: memref<1x8x1024xf32, #tpu.memory_space<vmem>>, %arg4: memref<1x8x1024xf32, #tpu.memory_space<vmem>>, %arg5: memref<1x8x1024xf32, #tpu.memory_space<vmem>>) attributes {dimension_semantics = [#tpu.dimension_semantics<arbitrary>], iteration_bounds = array<i64: 1>, scalar_prefetch = 0 : i64, scratch_operands = 0 : i64, tpu.core_type = #tpu.core_type<tc>, window_params = [{transform_indices = @transform_0, window_bounds = array<i64: 2, 1024>}, {transform_indices = @transform_1, window_bounds = array<i64: 2, 1024>}, {pipeline_mode = #tpu.pipeline_mode<synchronous>, transform_indices = @transform_2, window_bounds = array<i64: 1, 8, 1024>}, {pipeline_mode = #tpu.pipeline_mode<synchronous>, transform_indices = @transform_3, window_bounds = array<i64: 1, 8, 1024>}, {pipeline_mode = #tpu.pipeline_mode<synchronous>, transform_indices = @transform_4, window_bounds = array<i64: 1, 8, 1024>}]} {
    %c0_i32 = arith.constant 0 : i32
    %0 = arith.cmpi eq, %arg0, %c0_i32 : i32
    %1 = arith.extui %0 : i1 to i32
    %c0_i32_0 = arith.constant 0 : i32
    %2 = arith.cmpi ne, %1, %c0_i32_0 : i32
    scf.if %2 {
      %cst_33 = arith.constant 0.000000e+00 : f32
      %55 = vector.broadcast %cst_33 : f32 to vector<1x8x1024xf32>
      %c0_34 = arith.constant 0 : index
      %c0_35 = arith.constant 0 : index
      %c0_36 = arith.constant 0 : index
      %56 = vector.load %arg3[%c0_34, %c0_35, %c0_36] : memref<1x8x1024xf32, #tpu.memory_space<vmem>>, vector<1x8x1024xf32>
      tpu.vector_store %arg3[%c0_34, %c0_35, %c0_36], %55 {strides = array<i32>} : memref<1x8x1024xf32, #tpu.memory_space<vmem>>, vector<1x8x1024xf32>,
      %cst_37 = arith.constant 0.000000e+00 : f32
      %57 = vector.broadcast %cst_37 : f32 to vector<1x8x1024xf32>
      %c0_38 = arith.constant 0 : index
      %c0_39 = arith.constant 0 : index
      %c0_40 = arith.constant 0 : index
      %58 = vector.load %arg4[%c0_38, %c0_39, %c0_40] : memref<1x8x1024xf32, #tpu.memory_space<vmem>>, vector<1x8x1024xf32>
      tpu.vector_store %arg4[%c0_38, %c0_39, %c0_40], %57 {strides = array<i32>} : memref<1x8x1024xf32, #tpu.memory_space<vmem>>, vector<1x8x1024xf32>,
      %cst_41 = arith.constant 0.000000e+00 : f32
      %59 = vector.broadcast %cst_41 : f32 to vector<1x8x1024xf32>
      %c0_42 = arith.constant 0 : index
      %c0_43 = arith.constant 0 : index
      %c0_44 = arith.constant 0 : index
      %60 = vector.load %arg5[%c0_42, %c0_43, %c0_44] : memref<1x8x1024xf32, #tpu.memory_space<vmem>>, vector<1x8x1024xf32>
      tpu.vector_store %arg5[%c0_42, %c0_43, %c0_44], %59 {strides = array<i32>} : memref<1x8x1024xf32, #tpu.memory_space<vmem>>, vector<1x8x1024xf32>,
    } else {
    }
    %c0 = arith.constant 0 : index
    %c0_1 = arith.constant 0 : index
    %3 = vector.load %arg1[%c0, %c0_1] : memref<2x1024xf32, #tpu.memory_space<vmem>>, vector<2x1024xf32>
    %c0_2 = arith.constant 0 : index
    %c0_3 = arith.constant 0 : index
    %4 = vector.load %arg2[%c0_2, %c0_3] : memref<2x1024xf32, #tpu.memory_space<vmem>>, vector<2x1024xf32>
    %5 = tpu.iota {dimensions = array<i32: 0>} : vector<8x1024xi32>
    %6 = arith.mulf %3, %4 : vector<2x1024xf32>
    %cst = arith.constant dense<0.000000e+00> : vector<1024xf32>
    %7 = vector.multi_reduction <add>, %6, %cst [0] : vector<2x1024xf32> to vector<1024xf32>
    %8 = vector.shape_cast %7 : vector<1024xf32> to vector<1x1024xf32>
    %c0_4 = arith.constant 0 : index
    %c0_5 = arith.constant 0 : index
    %c0_6 = arith.constant 0 : index
    %9 = vector.load %arg3[%c0_4, %c0_5, %c0_6] : memref<1x8x1024xf32, #tpu.memory_space<vmem>>, vector<1x8x1024xf32>
    %c0_i32_7 = arith.constant 0 : i32
    %10 = vector.broadcast %c0_i32_7 : i32 to vector<8x1024xi32>
    %11 = arith.cmpi eq, %5, %10 : vector<8x1024xi32>
    %cst_8 = arith.constant 0.000000e+00 : f32
    %12 = vector.shape_cast %8 : vector<1x1024xf32> to vector<1x1024xf32>
    %13 = vector.broadcast %12 : vector<1x1024xf32> to vector<8x1024xf32>
    %14 = vector.broadcast %cst_8 : f32 to vector<8x1024xf32>
    %15 = arith.select %11, %13, %14 : vector<8x1024xi1>, vector<8x1024xf32>
    %16 = vector.shape_cast %15 : vector<8x1024xf32> to vector<1x8x1024xf32>
    %17 = arith.addf %9, %16 : vector<1x8x1024xf32>
    %c0_9 = arith.constant 0 : index
    %c0_10 = arith.constant 0 : index
    %c0_11 = arith.constant 0 : index
    %18 = vector.load %arg3[%c0_9, %c0_10, %c0_11] : memref<1x8x1024xf32, #tpu.memory_space<vmem>>, vector<1x8x1024xf32>
    tpu.vector_store %arg3[%c0_9, %c0_10, %c0_11], %17 {strides = array<i32>} : memref<1x8x1024xf32, #tpu.memory_space<vmem>>, vector<1x8x1024xf32>,
    %19 = arith.addf %3, %4 : vector<2x1024xf32>
    %cst_12 = arith.constant dense<0.000000e+00> : vector<1024xf32>
    %20 = vector.multi_reduction <add>, %19, %cst_12 [0] : vector<2x1024xf32> to vector<1024xf32>
    %21 = vector.shape_cast %20 : vector<1024xf32> to vector<1x1024xf32>
    %c0_13 = arith.constant 0 : index
    %c0_14 = arith.constant 0 : index
    %c0_15 = arith.constant 0 : index
    %22 = vector.load %arg4[%c0_13, %c0_14, %c0_15] : memref<1x8x1024xf32, #tpu.memory_space<vmem>>, vector<1x8x1024xf32>
    %c0_i32_16 = arith.constant 0 : i32
    %23 = vector.broadcast %c0_i32_16 : i32 to vector<8x1024xi32>
    %24 = arith.cmpi eq, %5, %23 : vector<8x1024xi32>
    %cst_17 = arith.constant 0.000000e+00 : f32
    %25 = vector.shape_cast %21 : vector<1x1024xf32> to vector<1x1024xf32>
    %26 = vector.broadcast %25 : vector<1x1024xf32> to vector<8x1024xf32>
    %27 = vector.broadcast %cst_17 : f32 to vector<8x1024xf32>
    %28 = arith.select %24, %26, %27 : vector<8x1024xi1>, vector<8x1024xf32>
    %29 = vector.shape_cast %28 : vector<8x1024xf32> to vector<1x8x1024xf32>
    %30 = arith.addf %22, %29 : vector<1x8x1024xf32>
    %c0_18 = arith.constant 0 : index
    %c0_19 = arith.constant 0 : index
    %c0_20 = arith.constant 0 : index
    %31 = vector.load %arg4[%c0_18, %c0_19, %c0_20] : memref<1x8x1024xf32, #tpu.memory_space<vmem>>, vector<1x8x1024xf32>
    tpu.vector_store %arg4[%c0_18, %c0_19, %c0_20], %30 {strides = array<i32>} : memref<1x8x1024xf32, #tpu.memory_space<vmem>>, vector<1x8x1024xf32>,
    %32 = math.log %3 : vector<2x1024xf32>
    %cst_21 = arith.constant -1.000000e+02 : f32
    %33 = vector.broadcast %cst_21 : f32 to vector<2x1024xf32>
    %34 = arith.maximumf %32, %33 : vector<2x1024xf32>
    %cst_22 = arith.constant 1.000000e+00 : f32
    %35 = vector.broadcast %cst_22 : f32 to vector<2x1024xf32>
    %36 = arith.subf %35, %3 : vector<2x1024xf32>
    %37 = math.log %36 : vector<2x1024xf32>
    %cst_23 = arith.constant -1.000000e+02 : f32
    %38 = vector.broadcast %cst_23 : f32 to vector<2x1024xf32>
    %39 = arith.maximumf %37, %38 : vector<2x1024xf32>
    %40 = arith.subf %34, %39 : vector<2x1024xf32>
    %41 = arith.mulf %4, %40 : vector<2x1024xf32>
    %42 = arith.addf %39, %41 : vector<2x1024xf32>
    %cst_24 = arith.constant dense<0.000000e+00> : vector<1024xf32>
    %43 = vector.multi_reduction <add>, %42, %cst_24 [0] : vector<2x1024xf32> to vector<1024xf32>
    %44 = vector.shape_cast %43 : vector<1024xf32> to vector<1x1024xf32>
    %c0_25 = arith.constant 0 : index
    %c0_26 = arith.constant 0 : index
    %c0_27 = arith.constant 0 : index
    %45 = vector.load %arg5[%c0_25, %c0_26, %c0_27] : memref<1x8x1024xf32, #tpu.memory_space<vmem>>, vector<1x8x1024xf32>
    %c0_i32_28 = arith.constant 0 : i32
    %46 = vector.broadcast %c0_i32_28 : i32 to vector<8x1024xi32>
    %47 = arith.cmpi eq, %5, %46 : vector<8x1024xi32>
    %cst_29 = arith.constant 0.000000e+00 : f32
    %48 = vector.shape_cast %44 : vector<1x1024xf32> to vector<1x1024xf32>
    %49 = vector.broadcast %48 : vector<1x1024xf32> to vector<8x1024xf32>
    %50 = vector.broadcast %cst_29 : f32 to vector<8x1024xf32>
    %51 = arith.select %47, %49, %50 : vector<8x1024xi1>, vector<8x1024xf32>
    %52 = vector.shape_cast %51 : vector<8x1024xf32> to vector<1x8x1024xf32>
    %53 = arith.addf %45, %52 : vector<1x8x1024xf32>
    %c0_30 = arith.constant 0 : index
    %c0_31 = arith.constant 0 : index
    %c0_32 = arith.constant 0 : index
    %54 = vector.load %arg5[%c0_30, %c0_31, %c0_32] : memref<1x8x1024xf32, #tpu.memory_space<vmem>>, vector<1x8x1024xf32>
    tpu.vector_store %arg5[%c0_30, %c0_31, %c0_32], %53 {strides = array<i32>} : memref<1x8x1024xf32, #tpu.memory_space<vmem>>, vector<1x8x1024xf32>,
    return
  }
  func.func @transform_0(%arg0: i32) -> (i32, i32) {
    %c0_i32 = arith.constant 0 : i32
    %c0_i32_0 = arith.constant 0 : i32
    return %arg0, %c0_i32 : i32, i32
  }
  func.func @transform_1(%arg0: i32) -> (i32, i32) {
    %c0_i32 = arith.constant 0 : i32
    %c0_i32_0 = arith.constant 0 : i32
    return %arg0, %c0_i32 : i32, i32
  }
  func.func @transform_2(%arg0: i32) -> (i32, i32, i32) {
    %c0_i32 = arith.constant 0 : i32
    %c0_i32_0 = arith.constant 0 : i32
    %c0_i32_1 = arith.constant 0 : i32
    %c0_i32_2 = arith.constant 0 : i32
    return %c0_i32, %c0_i32_0, %c0_i32_1 : i32, i32, i32
  }
  func.func @transform_3(%arg0: i32) -> (i32, i32, i32) {
    %c0_i32 = arith.constant 0 : i32
    %c0_i32_0 = arith.constant 0 : i32
    %c0_i32_1 = arith.constant 0 : i32
    %c0_i32_2 = arith.constant 0 : i32
    return %c0_i32, %c0_i32_0, %c0_i32_1 : i32, i32, i32
  }
  func.func @transform_4(%arg0: i32) -> (i32, i32, i32) {
    %c0_i32 = arith.constant 0 : i32
    %c0_i32_0 = arith.constant 0 : i32
    %c0_i32_1 = arith.constant 0 : i32
    %c0_i32_2 = arith.constant 0 : i32
    return %c0_i32, %c0_i32_0, %c0_i32_1 : i32, i32, i32
  }
}

</mosaic_0001>

<llo_original>
// kernel: tpu_custom_call.1
$region0: #{tpu_custom_call.1}
  #allocation0 [shape = 'u32[]', space=smem, size = 0x4, offset = 0x4, fixed_abs, tag = 'smem constant byte address 0x4 - core index']
  #allocation1 [shape = 'u32[144,128]{1,0:T(1,128)}', space=vmem, size = 0x12000, scoped, tag = 'internal scratch']
  %s0 = inlined_call_operand.hbm [shape: f32[2,1024], index: 0, kind: input, shape index: {}]
  %s1 = inlined_call_operand.hbm [shape: f32[2,1024], index: 1, kind: input, shape index: {}]
  %s2 = inlined_call_operand.hbm [shape: f32[1,8,1024], index: 2, kind: output, shape index: {0}]
  %s3 = inlined_call_operand.hbm [shape: f32[1,8,1024], index: 3, kind: output, shape index: {1}]
  %s4 = inlined_call_operand.hbm [shape: f32[1,8,1024], index: 4, kind: output, shape index: {2}]
  %5 = xla_tuple %s2, %s3, %s4
  %s6 = sld [smem:[#allocation0]]
  $region46: #{tpu_custom_call.1} parent=0
    _
  %s8 = ssub.s32 1, %s6
  %s9 = scalar_select 0, %s8, %s6
  $region1: #{tpu_custom_call.1} parent=0
    #allocation2 [shape = 'u8[8192]{0}', space=vmem, size = 0x2000, scoped, tag = 'input window, operand 0, single buffered']
    #allocation3 [shape = 's32[1]{0}', space=sflag, size = 0x4, scoped, tag = 'scoped memory for tpu_custom_call.1']
    #allocation4 [shape = 's32[1]{0}', space=sflag, size = 0x4, scoped, tag = 'scoped memory for tpu_custom_call.1']
    #allocation5 [shape = 'u8[8192]{0}', space=vmem, size = 0x2000, scoped, tag = 'input window, operand 1, single buffered']
    #allocation6 [shape = 's32[1]{0}', space=sflag, size = 0x4, scoped, tag = 'scoped memory for tpu_custom_call.1']
    #allocation7 [shape = 'u8[32768]{0}', space=vmem, size = 0x8000, scoped, tag = 'output window, operand 0, single buffered']
    #allocation8 [shape = 'u8[32768]{0}', space=vmem, size = 0x8000, scoped, tag = 'output window, operand 1, single buffered']
    #allocation9 [shape = 's32[1]{0}', space=sflag, size = 0x4, scoped, tag = 'scoped memory for tpu_custom_call.1']
    #allocation10 [shape = 'u8[32768]{0}', space=vmem, size = 0x8000, scoped, tag = 'output window, operand 2, single buffered']
    %10 = vsyncpa [#allocation3], 0
    %11 = vsyncpa [#allocation6], 0
    %12 = vsyncpa [#allocation4], 0
    %13 = vsyncpa [#allocation9], 0
    // Predicated region
    $region2: #{tpu_custom_call.1} parent=1 // pred_check
      _
    $region3: #{tpu_custom_call.1} parent=1 // pred_check_branch
      %15 = sbr.rel (0) target = $region5
    $region4: #{tpu_custom_call.1} parent=1 // pred_region
      %s17 = ssub.s32 256, 256
      %18 = vsyncadd [#allocation3], %s17
      %s20 = sshll.u32 [#allocation2], 4
      %s21 = int_to_ptr.vmem [resolvable:$true] %s20
      %23 = dma.hbm_to_vmem [thread:$0]  %s0, 256, %s21, [#allocation3]
    $region5: #{tpu_custom_call.1} parent=1 // pred_fallthru
      _
    // Predicated region
    $region6: #{tpu_custom_call.1} parent=1 // pred_check
      _
    $region7: #{tpu_custom_call.1} parent=1 // pred_check_branch
      %25 = sbr.rel (0) target = $region9
    $region8: #{tpu_custom_call.1} parent=1 // pred_region
      %s27 = ssub.s32 256, 256
      %28 = vsyncadd [#allocation6], %s27
      %s30 = sshll.u32 [#allocation5], 4
      %s31 = int_to_ptr.vmem [resolvable:$true] %s30
      %33 = dma.hbm_to_vmem [thread:$0]  %s1, 256, %s31, [#allocation6]
    $region9: #{tpu_custom_call.1} parent=1 // pred_fallthru
      _
    // Predicated region
    $region10: #{tpu_custom_call.1} parent=1 // pred_check
      _
    $region11: #{tpu_custom_call.1} parent=1 // pred_check_branch
      %35 = sbr.rel (0) target = $region13
    $region12: #{tpu_custom_call.1} parent=1 // pred_region
      %36 = dma.done [#allocation3], 256
    $region13: #{tpu_custom_call.1} parent=1 // pred_fallthru
      _
    // Predicated region
    $region14: #{tpu_custom_call.1} parent=1 // pred_check
      _
    $region15: #{tpu_custom_call.1} parent=1 // pred_check_branch
      %38 = sbr.rel (0) target = $region17
    $region16: #{tpu_custom_call.1} parent=1 // pred_region
      %39 = dma.done [#allocation6], 256
    $region17: #{tpu_custom_call.1} parent=1 // pred_fallthru
      _
    %p40 = scmp.eq.s32.totalorder 0, 0
    // Predicated region
    $region18: #{tpu_custom_call.1} parent=1 // pred_check
      %p41 = pneg %p40
    $region19: #{tpu_custom_call.1} parent=1 // pred_check_branch
      %43 = sbr.rel (%p41) target = $region21
    $region20: #{tpu_custom_call.1} parent=1 // pred_region
      %44 = vst [vmem:[#allocation7] sm:$0xff] 0.0
      %45 = vst [vmem:[#allocation7 + $0x8] sm:$0xff] 0.0
      %46 = vst [vmem:[#allocation7 + $0x10] sm:$0xff] 0.0
      %47 = vst [vmem:[#allocation7 + $0x18] sm:$0xff] 0.0
      %48 = vst [vmem:[#allocation7 + $0x20] sm:$0xff] 0.0
      %49 = vst [vmem:[#allocation7 + $0x28] sm:$0xff] 0.0
      %50 = vst [vmem:[#allocation7 + $0x30] sm:$0xff] 0.0
      %51 = vst [vmem:[#allocation7 + $0x38] sm:$0xff] 0.0
      %52 = vst [vmem:[#allocation8] sm:$0xff] 0.0
      %53 = vst [vmem:[#allocation8 + $0x8] sm:$0xff] 0.0
      %54 = vst [vmem:[#allocation8 + $0x10] sm:$0xff] 0.0
      %55 = vst [vmem:[#allocation8 + $0x18] sm:$0xff] 0.0
      %56 = vst [vmem:[#allocation8 + $0x20] sm:$0xff] 0.0
      %57 = vst [vmem:[#allocation8 + $0x28] sm:$0xff] 0.0
      %58 = vst [vmem:[#allocation8 + $0x30] sm:$0xff] 0.0
      %59 = vst [vmem:[#allocation8 + $0x38] sm:$0xff] 0.0
      %60 = vst [vmem:[#allocation10] sm:$0xff] 0.0
      %61 = vst [vmem:[#allocation10 + $0x8] sm:$0xff] 0.0
      %62 = vst [vmem:[#allocation10 + $0x10] sm:$0xff] 0.0
      %63 = vst [vmem:[#allocation10 + $0x18] sm:$0xff] 0.0
      %64 = vst [vmem:[#allocation10 + $0x20] sm:$0xff] 0.0
      %65 = vst [vmem:[#allocation10 + $0x28] sm:$0xff] 0.0
      %66 = vst [vmem:[#allocation10 + $0x30] sm:$0xff] 0.0
      %67 = vst [vmem:[#allocation10 + $0x38] sm:$0xff] 0.0
    $region21: #{tpu_custom_call.1} parent=1 // pred_fallthru
      _
    %v68 = vld [vmem:[#allocation2] sm:$0xff]
    %v69 = vld [vmem:[#allocation2 + $0x8] sm:$0xff]
    %v70 = vld [vmem:[#allocation5] sm:$0xff]
    %v71 = vld [vmem:[#allocation5 + $0x8] sm:$0xff]
    %v72 = vlaneseq
    %v73 = vshrl.u32 %v72, 7
    %v74 = vmul.f32 %v68, %v70
    %v75 = vmul.f32 %v69, %v71
    %v78 = vcombine.high %v74, %v74
    %v80 = vunpack.c.l.s4 1983009808
    %v81 = vunpack.c.0.s8 %v80
    %v82 = vlaneseq
    %v83 = vshrl.u32 %v82, 7
    %v84 = vsub.s32 %v81, %v83
    %v85 = vrot.slane %v74, %v84
    %v87 = vunpack.c.l.s4 1983009808
    %v88 = vunpack.c.0.s8 %v87
    %v89 = vlaneseq
    %v90 = vshrl.u32 %v89, 7
    %v91 = vsub.s32 %v88, %v90
    %v92 = vrot.slane %v78, %v91
    %v93 = vcombine.high %v85, %v85
    %v94 = vcombine.high %v92, %v92
    %v95 = vcombine.high %v75, %v75
    %v97 = vunpack.c.l.s4 1983009808
    %v98 = vunpack.c.0.s8 %v97
    %v99 = vlaneseq
    %v100 = vshrl.u32 %v99, 7
    %v101 = vsub.s32 %v98, %v100
    %v102 = vrot.slane %v75, %v101
    %v104 = vunpack.c.l.s4 1983009808
    %v105 = vunpack.c.0.s8 %v104
    %v106 = vlaneseq
    %v107 = vshrl.u32 %v106, 7
    %v108 = vsub.s32 %v105, %v107
    %v109 = vrot.slane %v95, %v108
    %v110 = vcombine.high %v102, %v102
    %v111 = vcombine.high %v109, %v109
    %vm120 = vcmask 1041408
    %v121 = vsel %vm120, %v85, 0.0
    %v122 = vrot.slane %v121, 4
    %v123 = vadd.f32 %v121, %v122
    %v124 = vrot.slane %v123, 2
    %v125 = vadd.f32 %v123, %v124
    %v126 = vrot.slane %v125, 1
    %v127 = vadd.f32 %v125, %v126
    %v128 = vsel %vm120, %v93, 0.0
    %v129 = vrot.slane %v128, 4
    %v130 = vadd.f32 %v128, %v129
    %v131 = vrot.slane %v130, 2
    %v132 = vadd.f32 %v130, %v131
    %v133 = vrot.slane %v132, 1
    %v134 = vadd.f32 %v132, %v133
    %v135 = vsel %vm120, %v92, 0.0
    %v136 = vrot.slane %v135, 4
    %v137 = vadd.f32 %v135, %v136
    %v138 = vrot.slane %v137, 2
    %v139 = vadd.f32 %v137, %v138
    %v140 = vrot.slane %v139, 1
    %v141 = vadd.f32 %v139, %v140
    %v142 = vsel %vm120, %v94, 0.0
    %v143 = vrot.slane %v142, 4
    %v144 = vadd.f32 %v142, %v143
    %v145 = vrot.slane %v144, 2
    %v146 = vadd.f32 %v144, %v145
    %v147 = vrot.slane %v146, 1
    %v148 = vadd.f32 %v146, %v147
    %v149 = vsel %vm120, %v102, 0.0
    %v150 = vrot.slane %v149, 4
    %v151 = vadd.f32 %v149, %v150
    %v152 = vrot.slane %v151, 2
    %v153 = vadd.f32 %v151, %v152
    %v154 = vrot.slane %v153, 1
    %v155 = vadd.f32 %v153, %v154
    %v156 = vsel %vm120, %v110, 0.0
    %v157 = vrot.slane %v156, 4
    %v158 = vadd.f32 %v156, %v157
    %v159 = vrot.slane %v158, 2
    %v160 = vadd.f32 %v158, %v159
    %v161 = vrot.slane %v160, 1
    %v162 = vadd.f32 %v160, %v161
    %v163 = vsel %vm120, %v109, 0.0
    %v164 = vrot.slane %v163, 4
    %v165 = vadd.f32 %v163, %v164
    %v166 = vrot.slane %v165, 2
    %v167 = vadd.f32 %v165, %v166
    %v168 = vrot.slane %v167, 1
    %v169 = vadd.f32 %v167, %v168
    %v170 = vsel %vm120, %v111, 0.0
    %v171 = vrot.slane %v170, 4
    %v172 = vadd.f32 %v170, %v171
    %v173 = vrot.slane %v172, 2
    %v174 = vadd.f32 %v172, %v173
    %v175 = vrot.slane %v174, 1
    %v176 = vadd.f32 %v174, %v175
    %v177 = vld [vmem:[#allocation7] sm:$0xff]
    %v178 = vld [vmem:[#allocation7 + $0x8] sm:$0xff]
    %v179 = vld [vmem:[#allocation7 + $0x10] sm:$0xff]
    %v180 = vld [vmem:[#allocation7 + $0x18] sm:$0xff]
    %v181 = vld [vmem:[#allocation7 + $0x20] sm:$0xff]
    %v182 = vld [vmem:[#allocation7 + $0x28] sm:$0xff]
    %v183 = vld [vmem:[#allocation7 + $0x30] sm:$0xff]
    %v184 = vld [vmem:[#allocation7 + $0x38] sm:$0xff]
    %vm185 = vcmp.eq.s32.totalorder %v73, 0
    %v186 = vsel %vm185, %v127, 0.0
    %v187 = vsel %vm185, %v134, 0.0
    %v188 = vsel %vm185, %v141, 0.0
    %v189 = vsel %vm185, %v148, 0.0
    %v190 = vsel %vm185, %v155, 0.0
    %v191 = vsel %vm185, %v162, 0.0
    %v192 = vsel %vm185, %v169, 0.0
    %v193 = vsel %vm185, %v176, 0.0
    %v194 = vadd.f32 %v177, %v186
    %v195 = vadd.f32 %v178, %v187
    %v196 = vadd.f32 %v179, %v188
    %v197 = vadd.f32 %v180, %v189
    %v198 = vadd.f32 %v181, %v190
    %v199 = vadd.f32 %v182, %v191
    %v200 = vadd.f32 %v183, %v192
    %v201 = vadd.f32 %v184, %v193
    %202 = vst [vmem:[#allocation7] sm:$0xff] %v194
    %203 = vst [vmem:[#allocation7 + $0x8] sm:$0xff] %v195
    %204 = vst [vmem:[#allocation7 + $0x10] sm:$0xff] %v196
    %205 = vst [vmem:[#allocation7 + $0x18] sm:$0xff] %v197
    %206 = vst [vmem:[#allocation7 + $0x20] sm:$0xff] %v198
    %207 = vst [vmem:[#allocation7 + $0x28] sm:$0xff] %v199
    %208 = vst [vmem:[#allocation7 + $0x30] sm:$0xff] %v200
    %209 = vst [vmem:[#allocation7 + $0x38] sm:$0xff] %v201
    %v210 = vadd.f32 %v68, %v70
    %v211 = vadd.f32 %v69, %v71
    %v214 = vcombine.high %v210, %v210
    %v216 = vunpack.c.l.s4 1983009808
    %v217 = vunpack.c.0.s8 %v216
    %v218 = vlaneseq
    %v219 = vshrl.u32 %v218, 7
    %v220 = vsub.s32 %v217, %v219
    %v221 = vrot.slane %v210, %v220
    %v223 = vunpack.c.l.s4 1983009808
    %v224 = vunpack.c.0.s8 %v223
    %v225 = vlaneseq
    %v226 = vshrl.u32 %v225, 7
    %v227 = vsub.s32 %v224, %v226
    %v228 = vrot.slane %v214, %v227
    %v229 = vcombine.high %v221, %v221
    %v230 = vcombine.high %v228, %v228
    %v231 = vcombine.high %v211, %v211
    %v233 = vunpack.c.l.s4 1983009808
    %v234 = vunpack.c.0.s8 %v233
    %v235 = vlaneseq
    %v236 = vshrl.u32 %v235, 7
    %v237 = vsub.s32 %v234, %v236
    %v238 = vrot.slane %v211, %v237
    %v240 = vunpack.c.l.s4 1983009808
    %v241 = vunpack.c.0.s8 %v240
    %v242 = vlaneseq
    %v243 = vshrl.u32 %v242, 7
    %v244 = vsub.s32 %v241, %v243
    %v245 = vrot.slane %v231, %v244
    %v246 = vcombine.high %v238, %v238
    %v247 = vcombine.high %v245, %v245
    %v256 = vsel %vm120, %v221, 0.0
    %v257 = vrot.slane %v256, 4
    %v258 = vadd.f32 %v256, %v257
    %v259 = vrot.slane %v258, 2
    %v260 = vadd.f32 %v258, %v259
    %v261 = vrot.slane %v260, 1
    %v262 = vadd.f32 %v260, %v261
    %v263 = vsel %vm120, %v229, 0.0
    %v264 = vrot.slane %v263, 4
    %v265 = vadd.f32 %v263, %v264
    %v266 = vrot.slane %v265, 2
    %v267 = vadd.f32 %v265, %v266
    %v268 = vrot.slane %v267, 1
    %v269 = vadd.f32 %v267, %v268
    %v270 = vsel %vm120, %v228, 0.0
    %v271 = vrot.slane %v270, 4
    %v272 = vadd.f32 %v270, %v271
    %v273 = vrot.slane %v272, 2
    %v274 = vadd.f32 %v272, %v273
    %v275 = vrot.slane %v274, 1
    %v276 = vadd.f32 %v274, %v275
    %v277 = vsel %vm120, %v230, 0.0
    %v278 = vrot.slane %v277, 4
    %v279 = vadd.f32 %v277, %v278
    %v280 = vrot.slane %v279, 2
    %v281 = vadd.f32 %v279, %v280
    %v282 = vrot.slane %v281, 1
    %v283 = vadd.f32 %v281, %v282
    %v284 = vsel %vm120, %v238, 0.0
    %v285 = vrot.slane %v284, 4
    %v286 = vadd.f32 %v284, %v285
    %v287 = vrot.slane %v286, 2
    %v288 = vadd.f32 %v286, %v287
    %v289 = vrot.slane %v288, 1
    %v290 = vadd.f32 %v288, %v289
    %v291 = vsel %vm120, %v246, 0.0
    %v292 = vrot.slane %v291, 4
    %v293 = vadd.f32 %v291, %v292
    %v294 = vrot.slane %v293, 2
    %v295 = vadd.f32 %v293, %v294
    %v296 = vrot.slane %v295, 1
    %v297 = vadd.f32 %v295, %v296
    %v298 = vsel %vm120, %v245, 0.0
    %v299 = vrot.slane %v298, 4
    %v300 = vadd.f32 %v298, %v299
    %v301 = vrot.slane %v300, 2
    %v302 = vadd.f32 %v300, %v301
    %v303 = vrot.slane %v302, 1
    %v304 = vadd.f32 %v302, %v303
    %v305 = vsel %vm120, %v247, 0.0
    %v306 = vrot.slane %v305, 4
    %v307 = vadd.f32 %v305, %v306
    %v308 = vrot.slane %v307, 2
    %v309 = vadd.f32 %v307, %v308
    %v310 = vrot.slane %v309, 1
    %v311 = vadd.f32 %v309, %v310
    %v312 = vld [vmem:[#allocation8] sm:$0xff]
    %v313 = vld [vmem:[#allocation8 + $0x8] sm:$0xff]
    %v314 = vld [vmem:[#allocation8 + $0x10] sm:$0xff]
    %v315 = vld [vmem:[#allocation8 + $0x18] sm:$0xff]
    %v316 = vld [vmem:[#allocation8 + $0x20] sm:$0xff]
    %v317 = vld [vmem:[#allocation8 + $0x28] sm:$0xff]
    %v318 = vld [vmem:[#allocation8 + $0x30] sm:$0xff]
    %v319 = vld [vmem:[#allocation8 + $0x38] sm:$0xff]
    %v320 = vsel %vm185, %v262, 0.0
    %v321 = vsel %vm185, %v269, 0.0
    %v322 = vsel %vm185, %v276, 0.0
    %v323 = vsel %vm185, %v283, 0.0
    %v324 = vsel %vm185, %v290, 0.0
    %v325 = vsel %vm185, %v297, 0.0
    %v326 = vsel %vm185, %v304, 0.0
    %v327 = vsel %vm185, %v311, 0.0
    %v328 = vadd.f32 %v312, %v320
    %v329 = vadd.f32 %v313, %v321
    %v330 = vadd.f32 %v314, %v322
    %v331 = vadd.f32 %v315, %v323
    %v332 = vadd.f32 %v316, %v324
    %v333 = vadd.f32 %v317, %v325
    %v334 = vadd.f32 %v318, %v326
    %v335 = vadd.f32 %v319, %v327
    %336 = vst [vmem:[#allocation8] sm:$0xff] %v328
    %337 = vst [vmem:[#allocation8 + $0x8] sm:$0xff] %v329
    %338 = vst [vmem:[#allocation8 + $0x10] sm:$0xff] %v330
    %339 = vst [vmem:[#allocation8 + $0x18] sm:$0xff] %v331
    %340 = vst [vmem:[#allocation8 + $0x20] sm:$0xff] %v332
    %341 = vst [vmem:[#allocation8 + $0x28] sm:$0xff] %v333
    %342 = vst [vmem:[#allocation8 + $0x30] sm:$0xff] %v334
    %343 = vst [vmem:[#allocation8 + $0x38] sm:$0xff] %v335
    %v344 = vlog2.pop %v68
    %v345 = vmul.f32 %v344, 0.6931472
    %v346 = vlog2.pop %v69
    %v347 = vmul.f32 %v346, 0.6931472
    %v348 = vmax.f32 %v345, -100.0
    %v349 = vmax.f32 %v347, -100.0
    %v350 = vsub.f32 1.0, %v68
    %v351 = vsub.f32 1.0, %v69
    %v352 = vlog2.pop %v350
    %v353 = vmul.f32 %v352, 0.6931472
    %v354 = vlog2.pop %v351
    %v355 = vmul.f32 %v354, 0.6931472
    %v356 = vmax.f32 %v353, -100.0
    %v357 = vmax.f32 %v355, -100.0
    %v358 = vsub.f32 %v348, %v356
    %v359 = vsub.f32 %v349, %v357
    %v360 = vmul.f32 %v70, %v358
    %v361 = vmul.f32 %v71, %v359
    %v362 = vadd.f32 %v356, %v360
    %v363 = vadd.f32 %v357, %v361
    %v366 = vcombine.high %v362, %v362
    %v368 = vunpack.c.l.s4 1983009808
    %v369 = vunpack.c.0.s8 %v368
    %v370 = vlaneseq
    %v371 = vshrl.u32 %v370, 7
    %v372 = vsub.s32 %v369, %v371
    %v373 = vrot.slane %v362, %v372
    %v375 = vunpack.c.l.s4 1983009808
    %v376 = vunpack.c.0.s8 %v375
    %v377 = vlaneseq
    %v378 = vshrl.u32 %v377, 7
    %v379 = vsub.s32 %v376, %v378
    %v380 = vrot.slane %v366, %v379
    %v381 = vcombine.high %v373, %v373
    %v382 = vcombine.high %v380, %v380
    %v383 = vcombine.high %v363, %v363
    %v385 = vunpack.c.l.s4 1983009808
    %v386 = vunpack.c.0.s8 %v385
    %v387 = vlaneseq
    %v388 = vshrl.u32 %v387, 7
    %v389 = vsub.s32 %v386, %v388
    %v390 = vrot.slane %v363, %v389
    %v392 = vunpack.c.l.s4 1983009808
    %v393 = vunpack.c.0.s8 %v392
    %v394 = vlaneseq
    %v395 = vshrl.u32 %v394, 7
    %v396 = vsub.s32 %v393, %v395
    %v397 = vrot.slane %v383, %v396
    %v398 = vcombine.high %v390, %v390
    %v399 = vcombine.high %v397, %v397
    %v408 = vsel %vm120, %v373, 0.0
    %v409 = vrot.slane %v408, 4
    %v410 = vadd.f32 %v408, %v409
    %v411 = vrot.slane %v410, 2
    %v412 = vadd.f32 %v410, %v411
    %v413 = vrot.slane %v412, 1
    %v414 = vadd.f32 %v412, %v413
    %v415 = vsel %vm120, %v381, 0.0
    %v416 = vrot.slane %v415, 4
    %v417 = vadd.f32 %v415, %v416
    %v418 = vrot.slane %v417, 2
    %v419 = vadd.f32 %v417, %v418
    %v420 = vrot.slane %v419, 1
    %v421 = vadd.f32 %v419, %v420
    %v422 = vsel %vm120, %v380, 0.0
    %v423 = vrot.slane %v422, 4
    %v424 = vadd.f32 %v422, %v423
    %v425 = vrot.slane %v424, 2
    %v426 = vadd.f32 %v424, %v425
    %v427 = vrot.slane %v426, 1
    %v428 = vadd.f32 %v426, %v427
    %v429 = vsel %vm120, %v382, 0.0
    %v430 = vrot.slane %v429, 4
    %v431 = vadd.f32 %v429, %v430
    %v432 = vrot.slane %v431, 2
    %v433 = vadd.f32 %v431, %v432
    %v434 = vrot.slane %v433, 1
    %v435 = vadd.f32 %v433, %v434
    %v436 = vsel %vm120, %v390, 0.0
    %v437 = vrot.slane %v436, 4
    %v438 = vadd.f32 %v436, %v437
    %v439 = vrot.slane %v438, 2
    %v440 = vadd.f32 %v438, %v439
    %v441 = vrot.slane %v440, 1
    %v442 = vadd.f32 %v440, %v441
    %v443 = vsel %vm120, %v398, 0.0
    %v444 = vrot.slane %v443, 4
    %v445 = vadd.f32 %v443, %v444
    %v446 = vrot.slane %v445, 2
    %v447 = vadd.f32 %v445, %v446
    %v448 = vrot.slane %v447, 1
    %v449 = vadd.f32 %v447, %v448
    %v450 = vsel %vm120, %v397, 0.0
    %v451 = vrot.slane %v450, 4
    %v452 = vadd.f32 %v450, %v451
    %v453 = vrot.slane %v452, 2
    %v454 = vadd.f32 %v452, %v453
    %v455 = vrot.slane %v454, 1
    %v456 = vadd.f32 %v454, %v455
    %v457 = vsel %vm120, %v399, 0.0
    %v458 = vrot.slane %v457, 4
    %v459 = vadd.f32 %v457, %v458
    %v460 = vrot.slane %v459, 2
    %v461 = vadd.f32 %v459, %v460
    %v462 = vrot.slane %v461, 1
    %v463 = vadd.f32 %v461, %v462
    %v464 = vld [vmem:[#allocation10] sm:$0xff]
    %v465 = vld [vmem:[#allocation10 + $0x8] sm:$0xff]
    %v466 = vld [vmem:[#allocation10 + $0x10] sm:$0xff]
    %v467 = vld [vmem:[#allocation10 + $0x18] sm:$0xff]
    %v468 = vld [vmem:[#allocation10 + $0x20] sm:$0xff]
    %v469 = vld [vmem:[#allocation10 + $0x28] sm:$0xff]
    %v470 = vld [vmem:[#allocation10 + $0x30] sm:$0xff]
    %v471 = vld [vmem:[#allocation10 + $0x38] sm:$0xff]
    %v472 = vsel %vm185, %v414, 0.0
    %v473 = vsel %vm185, %v421, 0.0
    %v474 = vsel %vm185, %v428, 0.0
    %v475 = vsel %vm185, %v435, 0.0
    %v476 = vsel %vm185, %v442, 0.0
    %v477 = vsel %vm185, %v449, 0.0
    %v478 = vsel %vm185, %v456, 0.0
    %v479 = vsel %vm185, %v463, 0.0
    %v480 = vadd.f32 %v464, %v472
    %v481 = vadd.f32 %v465, %v473
    %v482 = vadd.f32 %v466, %v474
    %v483 = vadd.f32 %v467, %v475
    %v484 = vadd.f32 %v468, %v476
    %v485 = vadd.f32 %v469, %v477
    %v486 = vadd.f32 %v470, %v478
    %v487 = vadd.f32 %v471, %v479
    %488 = vst [vmem:[#allocation10] sm:$0xff] %v480
    %489 = vst [vmem:[#allocation10 + $0x8] sm:$0xff] %v481
    %490 = vst [vmem:[#allocation10 + $0x10] sm:$0xff] %v482
    %491 = vst [vmem:[#allocation10 + $0x18] sm:$0xff] %v483
    %492 = vst [vmem:[#allocation10 + $0x20] sm:$0xff] %v484
    %493 = vst [vmem:[#allocation10 + $0x28] sm:$0xff] %v485
    %494 = vst [vmem:[#allocation10 + $0x30] sm:$0xff] %v486
    %495 = vst [vmem:[#allocation10 + $0x38] sm:$0xff] %v487
    // Predicated region
    $region22: #{tpu_custom_call.1} parent=1 // pred_check
      _
    $region23: #{tpu_custom_call.1} parent=1 // pred_check_branch
      %497 = sbr.rel (0) target = $region25
    $region24: #{tpu_custom_call.1} parent=1 // pred_region
      %s499 = ssub.s32 1024, 1024
      %500 = vsyncadd [#allocation4], %s499
      %s502 = sshll.u32 [#allocation7], 4
      %s503 = int_to_ptr.vmem [resolvable:$true] %s502
      %505 = dma.vmem_to_hbm [thread:$0]  %s503, 1024, %s2, [#allocation4]
    $region25: #{tpu_custom_call.1} parent=1 // pred_fallthru
      _
    // Predicated region
    $region26: #{tpu_custom_call.1} parent=1 // pred_check
      _
    $region27: #{tpu_custom_call.1} parent=1 // pred_check_branch
      %507 = sbr.rel (0) target = $region29
    $region28: #{tpu_custom_call.1} parent=1 // pred_region
      %s509 = ssub.s32 1024, 1024
      %510 = vsyncadd [#allocation9], %s509
      %s512 = sshll.u32 [#allocation8], 4
      %s513 = int_to_ptr.vmem [resolvable:$true] %s512
      %515 = dma.vmem_to_hbm [thread:$0]  %s513, 1024, %s3, [#allocation9]
    $region29: #{tpu_custom_call.1} parent=1 // pred_fallthru
      _
    // Predicated region
    $region30: #{tpu_custom_call.1} parent=1 // pred_check
      _
    $region31: #{tpu_custom_call.1} parent=1 // pred_check_branch
      %517 = sbr.rel (0) target = $region33
    $region32: #{tpu_custom_call.1} parent=1 // pred_region
      %s519 = ssub.s32 1024, 1024
      %520 = vsyncadd [#allocation9], %s519
      %s522 = sshll.u32 [#allocation10], 4
      %s523 = int_to_ptr.vmem [resolvable:$true] %s522
      %525 = dma.vmem_to_hbm [thread:$0]  %s523, 1024, %s4, [#allocation9]
    $region33: #{tpu_custom_call.1} parent=1 // pred_fallthru
      _
    // Predicated region
    $region34: #{tpu_custom_call.1} parent=1 // pred_check
      _
    $region35: #{tpu_custom_call.1} parent=1 // pred_check_branch
      %527 = sbr.rel (0) target = $region37
    $region36: #{tpu_custom_call.1} parent=1 // pred_region
      %528 = dma.done [#allocation4], 1024
    $region37: #{tpu_custom_call.1} parent=1 // pred_fallthru
      _
    // Predicated region
    $region38: #{tpu_custom_call.1} parent=1 // pred_check
      _
    $region39: #{tpu_custom_call.1} parent=1 // pred_check_branch
      %530 = sbr.rel (0) target = $region41
    $region40: #{tpu_custom_call.1} parent=1 // pred_region
      %531 = dma.done [#allocation9], 1024
    $region41: #{tpu_custom_call.1} parent=1 // pred_fallthru
      _
    // Predicated region
    $region42: #{tpu_custom_call.1} parent=1 // pred_check
      _
    $region43: #{tpu_custom_call.1} parent=1 // pred_check_branch
      %533 = sbr.rel (0) target = $region45
    $region44: #{tpu_custom_call.1} parent=1 // pred_region
      %534 = dma.done [#allocation9], 1024
    $region45: #{tpu_custom_call.1} parent=1 // pred_fallthru
      _
    %535 = vsyncpa [#allocation3], 1
    %536 = vsyncpa [#allocation6], 1
    %537 = vsyncpa [#allocation4], 1
    %538 = vsyncpa [#allocation9], 1

</llo_original>
